<compile_context>
chip_gen: v5e
topology: v5e:2x2
jax: 0.10.0
libtpu: 0.0.40
codegen_flags: <defaults>
</compile_context>

<pallas_src>
import functools

import jax
import jax.numpy as jnp
from jax.experimental import pallas as pl
from jax.experimental.pallas import tpu as pltpu


def _fused_kernel(eps, xse_ref, w1_ref, b1_ref, x_ref, w2_ref, gamma_ref,
                  beta_ref, o_ref):
  """Single grid step; everything resident in VMEM.

  xse_ref:   [1, C_se]         f32   squeezed SE input (x712)
  w1_ref:    [C_se, C_mid]     bf16  conv2d221 weight, pre-transposed
  b1_ref:    [1, C_mid]        f32   conv2d221 bias
  x_ref:     [C_mid, P_blk]    f32/bf16  x709 channels-major; cols >= P are padding
  w2_ref:    [C_mid, C_out]    bf16  conv2d222 weight, pre-transposed
  gamma_ref: [1, C_out]        f32   batchnorm weight
  beta_ref:  [1, C_out]        f32   batchnorm bias
  o_ref:     [P, C_out]              normalized output, pixels-major (lane dense)
  """
  p = o_ref.shape[0]

  # --- SE path: 1x1 conv (matvec) + bias + sigmoid; bf16 x bf16 -> f32 on MXU ---
  s = jnp.dot(xse_ref[...].astype(jnp.bfloat16), w1_ref[...],
              preferred_element_type=jnp.float32)
  s = jax.nn.sigmoid(s + b1_ref[...])                        # [1, C_mid] f32

  # --- on-chip transpose of the channels-major feature map (aligned shapes),
  #     then drop the padded pixel rows with a static slice ---
  x_t = jnp.transpose(x_ref[...], (1, 0))[:p, :]             # [P, C_mid]

  # --- gate (f32 VPU) and cast to bf16 for the MXU ---
  xm = (x_t * s).astype(jnp.bfloat16)                        # [P, C_mid]

  # --- 1x1 conv over channels: bf16 x bf16 matmul, f32 accumulate ---
  y = jnp.dot(xm, w2_ref[...], preferred_element_type=jnp.float32)   # [P, C_out]

  # --- BatchNorm2d (training-mode batch stats), two-pass variance over pixels ---
  inv_p = 1.0 / p                                            # exact: only P real rows
  mean = jnp.sum(y, axis=0, keepdims=True) * inv_p
  d = y - mean
  var = jnp.sum(d * d, axis=0, keepdims=True) * inv_p        # biased variance
  inv = jax.lax.rsqrt(var + eps)
  o_ref[...] = (gamma_ref[...] * d * inv + beta_ref[...]).astype(o_ref.dtype)


def prepare_params(w1, b1, w2, gamma, beta):
  """One-time (model-load) layout / dtype preparation. Do NOT call per step."""
  w1 = jnp.asarray(w1, jnp.float32).reshape(w1.shape[0], -1)   # [C_mid, C_se]
  w2 = jnp.asarray(w2, jnp.float32).reshape(w2.shape[0], -1)   # [C_out, C_mid]
  c_mid, _ = w1.shape
  c_out = w2.shape[0]
  return dict(
      w1_t=w1.T.astype(jnp.bfloat16),                          # [C_se, C_mid] bf16
      b1=jnp.asarray(b1, jnp.float32).reshape(1, c_mid),       # [1, C_mid]
      w2_t=w2.T.astype(jnp.bfloat16),                          # [C_mid, C_out] bf16
      gamma=jnp.asarray(gamma, jnp.float32).reshape(1, c_out),
      beta=jnp.asarray(beta, jnp.float32).reshape(1, c_out),
  )


@functools.partial(jax.jit, static_argnames=("eps", "out_dtype"))
def fused_se_conv_bn_nchw(x712, x709, params, eps=1e-3, out_dtype=jnp.float32):
  """NCHW fused op.  x712: [1, C_se, 1, 1]; x709: [1, C_mid, H, W]."""
  n, c_mid, h, w = x709.shape
  assert n == 1, "module is defined for batch size 1 (BN reduction over pixels)"
  p = h * w
  c_se = params["w1_t"].shape[0]
  c_out = params["w2_t"].shape[1]

  xse = x712.reshape(1, c_se)        # free reshape
  x_cp = x709.reshape(c_mid, p)      # free reshape: NCHW-native channels-major

  # Lane-aligned pixel block; the kernel slices back to the real P rows, so the
  # MXU / BN never see the padding and stats stay exact.
  p_blk = ((p + 127) // 128) * 128

  cost = pl.CostEstimate(
      flops=2 * p * c_mid * c_out + 2 * c_se * c_mid,
      transcendentals=c_mid,
      bytes_accessed=(x_cp.size * x_cp.dtype.itemsize
                      + params["w1_t"].size * 2 + params["w2_t"].size * 2
                      + p * c_out * jnp.dtype(out_dtype).itemsize
                      + (c_se + 3 * c_mid + 2 * c_out) * 4),
  )

  out_pc = pl.pallas_call(
      functools.partial(_fused_kernel, float(eps)),
      out_shape=jax.ShapeDtypeStruct((p, c_out), out_dtype),
      grid=(1,),
      in_specs=[
          pl.BlockSpec((1, c_se), lambda i: (0, 0)),         # xse
          pl.BlockSpec((c_se, c_mid), lambda i: (0, 0)),     # w1_t (bf16)
          pl.BlockSpec((1, c_mid), lambda i: (0, 0)),        # b1
          pl.BlockSpec((c_mid, p_blk), lambda i: (0, 0)),    # x (channels-major)
          pl.BlockSpec((c_mid, c_out), lambda i: (0, 0)),    # w2_t (bf16)
          pl.BlockSpec((1, c_out), lambda i: (0, 0)),        # gamma
          pl.BlockSpec((1, c_out), lambda i: (0, 0)),        # beta
      ],
      out_specs=pl.BlockSpec((p, c_out), lambda i: (0, 0)),
      compiler_params=pltpu.CompilerParams(
          dimension_semantics=("arbitrary",)),
      cost_estimate=cost,
  )(xse, params["w1_t"], params["b1"], x_cp, params["w2_t"],
    params["gamma"], params["beta"])

  # Small output-side adapter back to NCHW (75 KB f32 / 37 KB bf16).  If the
  # consumer accepts pixels-major activations, return out_pc directly instead.
  return jnp.transpose(out_pc, (1, 0)).reshape(1, c_out, h, w)


def _reference(x712, x709, w1, b1, w2, gamma, beta, eps=1e-3):
  """Pure-JAX f32 reference of the PyTorch forward (training-mode BN)."""
  s = jax.nn.sigmoid(jnp.einsum('oc,nchw->nohw', w1, x712) +
                     b1[None, :, None, None])
  xm = s * x709
  y = jnp.einsum('oc,nchw->nohw', w2, xm)
  mean = jnp.mean(y, axis=(0, 2, 3), keepdims=True)
  var = jnp.mean((y - mean) ** 2, axis=(0, 2, 3), keepdims=True)
  return (gamma[None, :, None, None] * (y - mean) *
          jax.lax.rsqrt(var + eps) + beta[None, :, None, None])


if __name__ == "__main__":
  # Small shapes consistent with the module (original: 96 / 2304 / 384, 7x7).
  # H = W = 7 is kept so the ragged pixel count (P = 49) of the real module is
  # exercised end-to-end.
  N, C_SE, C_MID, C_OUT, H, W = 1, 32, 512, 256, 7, 7

  key = jax.random.PRNGKey(0)
  k = jax.random.split(key, 7)
  x712 = jax.random.normal(k[0], (N, C_SE, 1, 1), jnp.float32)
  x709 = jax.random.normal(k[1], (N, C_MID, H, W), jnp.float32)
  # Parameters (shapes follow the PyTorch module's __init__).
  w1 = jax.random.normal(k[2], (C_MID, C_SE), jnp.float32) * 0.05      # conv2d221.weight
  b1 = jax.random.normal(k[3], (C_MID,), jnp.float32) * 0.05           # conv2d221.bias
  w2 = jax.random.normal(k[4], (C_OUT, C_MID), jnp.float32) * 0.02     # conv2d222.weight
  gamma = 1.0 + 0.1 * jax.random.normal(k[5], (C_OUT,), jnp.float32)   # bn weight
  beta = 0.1 * jax.random.normal(k[6], (C_OUT,), jnp.float32)          # bn bias

  # One-time weight prep (pre-transpose + bf16 cast); reused every call.
  params = prepare_params(w1, b1, w2, gamma, beta)

  out = fused_se_conv_bn_nchw(x712, x709, params, eps=1e-3)
  out = jax.block_until_ready(out)

  ref = _reference(x712, x709, w1, b1, w2, gamma, beta, eps=1e-3)
  assert out.shape == (N, C_OUT, H, W)
  # Tolerance loosened vs. the f32 reference because the main matmul runs in bf16.
  err = float(jnp.max(jnp.abs(out - ref)))
  assert jnp.allclose(out, ref, atol=5e-2, rtol=5e-2), (
      "mismatch vs reference, max abs err = %g" % err)

  print("KERNEL_OK")
</pallas_src>

<mosaic_0001>
module attributes {stable_mosaic.version = 11 : i64} {
  func.func @_fused_kernel(%arg0: i32, %arg1: memref<1x32xf32, #tpu.memory_space<vmem>>, %arg2: memref<32x512xbf16, #tpu.memory_space<vmem>>, %arg3: memref<1x512xf32, #tpu.memory_space<vmem>>, %arg4: memref<512x128xf32, #tpu.memory_space<vmem>>, %arg5: memref<512x256xbf16, #tpu.memory_space<vmem>>, %arg6: memref<1x256xf32, #tpu.memory_space<vmem>>, %arg7: memref<1x256xf32, #tpu.memory_space<vmem>>, %arg8: memref<49x256xf32, #tpu.memory_space<vmem>>) attributes {dimension_semantics = [#tpu.dimension_semantics<arbitrary>], iteration_bounds = array<i64: 1>, scalar_prefetch = 0 : i64, scratch_operands = 0 : i64, tpu.core_type = #tpu.core_type<tc>, window_params = [{pipeline_mode = #tpu.pipeline_mode<synchronous>, transform_indices = @transform_0, window_bounds = array<i64: 1, 32>}, {pipeline_mode = #tpu.pipeline_mode<synchronous>, transform_indices = @transform_1, window_bounds = array<i64: 32, 512>}, {pipeline_mode = #tpu.pipeline_mode<synchronous>, transform_indices = @transform_2, window_bounds = array<i64: 1, 512>}, {transform_indices = @transform_3, window_bounds = array<i64: 512, 128>}, {pipeline_mode = #tpu.pipeline_mode<synchronous>, transform_indices = @transform_4, window_bounds = array<i64: 512, 256>}, {pipeline_mode = #tpu.pipeline_mode<synchronous>, transform_indices = @transform_5, window_bounds = array<i64: 1, 256>}, {pipeline_mode = #tpu.pipeline_mode<synchronous>, transform_indices = @transform_6, window_bounds = array<i64: 1, 256>}, {pipeline_mode = #tpu.pipeline_mode<synchronous>, transform_indices = @transform_7, window_bounds = array<i64: 49, 256>}]} {
    %c0 = arith.constant 0 : index
    %c0_0 = arith.constant 0 : index
    %0 = vector.load %arg1[%c0, %c0_0] : memref<1x32xf32, #tpu.memory_space<vmem>>, vector<1x32xf32>
    %1 = arith.truncf %0 : vector<1x32xf32> to vector<1x32xbf16>
    %c0_1 = arith.constant 0 : index
    %c0_2 = arith.constant 0 : index
    %2 = vector.load %arg2[%c0_1, %c0_2] : memref<32x512xbf16, #tpu.memory_space<vmem>>, vector<32x512xbf16>
    %cst = arith.constant dense<0.000000e+00> : vector<1x512xf32>
    %3 = tpu.matmul %1, %2, %cst {dimension_numbers = #tpu.dot_dimension_numbers<[1], [0], [0], [1], [0, 0, 1, 1], [], []>} : vector<1x32xbf16>, vector<32x512xbf16>, vector<1x512xf32> -> vector<1x512xf32>
    %c0_3 = arith.constant 0 : index
    %c0_4 = arith.constant 0 : index
    %4 = vector.load %arg3[%c0_3, %c0_4] : memref<1x512xf32, #tpu.memory_space<vmem>>, vector<1x512xf32>
    %5 = arith.addf %3, %4 : vector<1x512xf32>
    %6 = arith.negf %5 : vector<1x512xf32>
    %7 = math.exp %6 : vector<1x512xf32>
    %cst_5 = arith.constant 1.000000e+00 : f32
    %8 = vector.broadcast %cst_5 : f32 to vector<1x512xf32>
    %9 = arith.addf %8, %7 : vector<1x512xf32>
    %10 = arith.divf %8, %9 : vector<1x512xf32>
    %c0_6 = arith.constant 0 : index
    %c0_7 = arith.constant 0 : index
    %11 = vector.load %arg4[%c0_6, %c0_7] : memref<512x128xf32, #tpu.memory_space<vmem>>, vector<512x128xf32>
    %12 = tpu.transpose %11, [1, 0] : vector<512x128xf32> -> vector<128x512xf32>
    %13 = vector.extract_strided_slice %12 {offsets = [0, 0], sizes = [49, 512], strides = [1, 1]} : vector<128x512xf32> to vector<49x512xf32>
    %14 = vector.broadcast %10 : vector<1x512xf32> to vector<49x512xf32>
    %15 = arith.mulf %13, %14 : vector<49x512xf32>
    %16 = arith.truncf %15 : vector<49x512xf32> to vector<49x512xbf16>
    %c0_8 = arith.constant 0 : index
    %c0_9 = arith.constant 0 : index
    %17 = vector.load %arg5[%c0_8, %c0_9] : memref<512x256xbf16, #tpu.memory_space<vmem>>, vector<512x256xbf16>
    %cst_10 = arith.constant dense<0.000000e+00> : vector<49x256xf32>
    %18 = tpu.matmul %16, %17, %cst_10 {dimension_numbers = #tpu.dot_dimension_numbers<[1], [0], [0], [1], [0, 0, 1, 1], [], []>} : vector<49x512xbf16>, vector<512x256xbf16>, vector<49x256xf32> -> vector<49x256xf32>
    %cst_11 = arith.constant dense<0.000000e+00> : vector<256xf32>
    %19 = vector.multi_reduction <add>, %18, %cst_11 [0] : vector<49x256xf32> to vector<256xf32>
    %20 = vector.shape_cast %19 : vector<256xf32> to vector<1x256xf32>
    %cst_12 = arith.constant 0.0204081628 : f32
    %21 = vector.broadcast %cst_12 : f32 to vector<1x256xf32>
    %22 = arith.mulf %20, %21 : vector<1x256xf32>
    %23 = vector.broadcast %22 : vector<1x256xf32> to vector<49x256xf32>
    %24 = arith.subf %18, %23 : vector<49x256xf32>
    %25 = arith.mulf %24, %24 : vector<49x256xf32>
    %cst_13 = arith.constant dense<0.000000e+00> : vector<256xf32>
    %26 = vector.multi_reduction <add>, %25, %cst_13 [0] : vector<49x256xf32> to vector<256xf32>
    %27 = vector.shape_cast %26 : vector<256xf32> to vector<1x256xf32>
    %cst_14 = arith.constant 0.0204081628 : f32
    %28 = vector.broadcast %cst_14 : f32 to vector<1x256xf32>
    %29 = arith.mulf %27, %28 : vector<1x256xf32>
    %cst_15 = arith.constant 1.000000e-03 : f32
    %30 = vector.broadcast %cst_15 : f32 to vector<1x256xf32>
    %31 = arith.addf %29, %30 : vector<1x256xf32>
    %32 = math.rsqrt %31 : vector<1x256xf32>
    %c0_16 = arith.constant 0 : index
    %c0_17 = arith.constant 0 : index
    %33 = vector.load %arg6[%c0_16, %c0_17] : memref<1x256xf32, #tpu.memory_space<vmem>>, vector<1x256xf32>
    %34 = vector.broadcast %33 : vector<1x256xf32> to vector<49x256xf32>
    %35 = arith.mulf %34, %24 : vector<49x256xf32>
    %36 = vector.broadcast %32 : vector<1x256xf32> to vector<49x256xf32>
    %37 = arith.mulf %35, %36 : vector<49x256xf32>
    %c0_18 = arith.constant 0 : index
    %c0_19 = arith.constant 0 : index
    %38 = vector.load %arg7[%c0_18, %c0_19] : memref<1x256xf32, #tpu.memory_space<vmem>>, vector<1x256xf32>
    %39 = vector.broadcast %38 : vector<1x256xf32> to vector<49x256xf32>
    %40 = arith.addf %37, %39 : vector<49x256xf32>
    %c0_20 = arith.constant 0 : index
    %c0_21 = arith.constant 0 : index
    %41 = vector.load %arg8[%c0_20, %c0_21] : memref<49x256xf32, #tpu.memory_space<vmem>>, vector<49x256xf32>
    tpu.vector_store %arg8[%c0_20, %c0_21], %40 {strides = array<i32>} : memref<49x256xf32, #tpu.memory_space<vmem>>, vector<49x256xf32>,
    return
  }
  func.func @transform_0(%arg0: i32) -> (i32, i32) {
    %c0_i32 = arith.constant 0 : i32
    %c0_i32_0 = arith.constant 0 : i32
    %c0_i32_1 = arith.constant 0 : i32
    return %c0_i32, %c0_i32_0 : i32, i32
  }
  func.func @transform_1(%arg0: i32) -> (i32, i32) {
    %c0_i32 = arith.constant 0 : i32
    %c0_i32_0 = arith.constant 0 : i32
    %c0_i32_1 = arith.constant 0 : i32
    return %c0_i32, %c0_i32_0 : i32, i32
  }
  func.func @transform_2(%arg0: i32) -> (i32, i32) {
    %c0_i32 = arith.constant 0 : i32
    %c0_i32_0 = arith.constant 0 : i32
    %c0_i32_1 = arith.constant 0 : i32
    return %c0_i32, %c0_i32_0 : i32, i32
  }
  func.func @transform_3(%arg0: i32) -> (i32, i32) {
    %c0_i32 = arith.constant 0 : i32
    %c0_i32_0 = arith.constant 0 : i32
    %c0_i32_1 = arith.constant 0 : i32
    return %c0_i32, %c0_i32_0 : i32, i32
  }
  func.func @transform_4(%arg0: i32) -> (i32, i32) {
    %c0_i32 = arith.constant 0 : i32
    %c0_i32_0 = arith.constant 0 : i32
    %c0_i32_1 = arith.constant 0 : i32
    return %c0_i32, %c0_i32_0 : i32, i32
  }
  func.func @transform_5(%arg0: i32) -> (i32, i32) {
    %c0_i32 = arith.constant 0 : i32
    %c0_i32_0 = arith.constant 0 : i32
    %c0_i32_1 = arith.constant 0 : i32
    return %c0_i32, %c0_i32_0 : i32, i32
  }
  func.func @transform_6(%arg0: i32) -> (i32, i32) {
    %c0_i32 = arith.constant 0 : i32
    %c0_i32_0 = arith.constant 0 : i32
    %c0_i32_1 = arith.constant 0 : i32
    return %c0_i32, %c0_i32_0 : i32, i32
  }
  func.func @transform_7(%arg0: i32) -> (i32, i32) {
    %c0_i32 = arith.constant 0 : i32
    %c0_i32_0 = arith.constant 0 : i32
    %c0_i32_1 = arith.constant 0 : i32
    return %c0_i32, %c0_i32_0 : i32, i32
  }
}

</mosaic_0001>

<llo_original>
// kernel: fused_se_conv_bn_nchw.1
$region0: #{fused_se_conv_bn_nchw.1}
  #allocation0 [shape = 'u32[]', space=smem, size = 0x4, offset = 0x4, fixed_abs, tag = 'smem constant byte address 0x4 - core index']
  #allocation1 [shape = 'u32[72,128]{1,0:T(1,128)}', space=vmem, size = 0x9000, scoped, tag = 'internal scratch']
  %s0 = inlined_call_operand.vmem [shape: f32[1,32], index: 0, kind: input, shape index: {}]
  %s1 = inlined_call_operand.vmem [shape: bf16[32,512], index: 1, kind: input, shape index: {}]
  %s2 = inlined_call_operand.vmem [shape: f32[1,512], index: 2, kind: input, shape index: {}]
  %s3 = inlined_call_operand.vmem [shape: f32[512,49], index: 3, kind: input, shape index: {}]
  %s4 = inlined_call_operand.vmem [shape: bf16[512,256], index: 4, kind: input, shape index: {}]
  %s5 = inlined_call_operand.vmem [shape: f32[1,256], index: 5, kind: input, shape index: {}]
  %s6 = inlined_call_operand.vmem [shape: f32[1,256], index: 6, kind: input, shape index: {}]
  %s7 = inlined_call_operand.vmem [shape: f32[49,256], index: 7, kind: output, shape index: {}]
  %s8 = sld [smem:[#allocation0]]
  $region38: #{fused_se_conv_bn_nchw.1} parent=0
    _
  %s10 = ssub.s32 1, %s8
  %s11 = scalar_select 0, %s10, %s8
  // Predicated region
  $region2: #{fused_se_conv_bn_nchw.1} parent=0 // pred_check
    _
  $region3: #{fused_se_conv_bn_nchw.1} parent=0 // pred_check_branch
    %13 = sbr.rel (0) target = $region5
  $region4: #{fused_se_conv_bn_nchw.1} parent=0 // pred_region
    _
  $region5: #{fused_se_conv_bn_nchw.1} parent=0 // pred_fallthru
    _
  // Predicated region
  $region6: #{fused_se_conv_bn_nchw.1} parent=0 // pred_check
    _
  $region7: #{fused_se_conv_bn_nchw.1} parent=0 // pred_check_branch
    %15 = sbr.rel (0) target = $region9
  $region8: #{fused_se_conv_bn_nchw.1} parent=0 // pred_region
    _
  $region9: #{fused_se_conv_bn_nchw.1} parent=0 // pred_fallthru
    _
  // Predicated region
  $region10: #{fused_se_conv_bn_nchw.1} parent=0 // pred_check
    _
  $region11: #{fused_se_conv_bn_nchw.1} parent=0 // pred_check_branch
    %17 = sbr.rel (0) target = $region13
  $region12: #{fused_se_conv_bn_nchw.1} parent=0 // pred_region
    _
  $region13: #{fused_se_conv_bn_nchw.1} parent=0 // pred_fallthru
    _
  // Predicated region
  $region14: #{fused_se_conv_bn_nchw.1} parent=0 // pred_check
    _
  $region15: #{fused_se_conv_bn_nchw.1} parent=0 // pred_check_branch
    %19 = sbr.rel (0) target = $region17
  $region16: #{fused_se_conv_bn_nchw.1} parent=0 // pred_region
    _
  $region17: #{fused_se_conv_bn_nchw.1} parent=0 // pred_fallthru
    _
  // Predicated region
  $region18: #{fused_se_conv_bn_nchw.1} parent=0 // pred_check
    _
  $region19: #{fused_se_conv_bn_nchw.1} parent=0 // pred_check_branch
    %21 = sbr.rel (0) target = $region21
  $region20: #{fused_se_conv_bn_nchw.1} parent=0 // pred_region
    _
  $region21: #{fused_se_conv_bn_nchw.1} parent=0 // pred_fallthru
    _
  // Predicated region
  $region22: #{fused_se_conv_bn_nchw.1} parent=0 // pred_check
    _
  $region23: #{fused_se_conv_bn_nchw.1} parent=0 // pred_check_branch
    %23 = sbr.rel (0) target = $region25
  $region24: #{fused_se_conv_bn_nchw.1} parent=0 // pred_region
    _
  $region25: #{fused_se_conv_bn_nchw.1} parent=0 // pred_fallthru
    _
  // Predicated region
  $region26: #{fused_se_conv_bn_nchw.1} parent=0 // pred_check
    _
  $region27: #{fused_se_conv_bn_nchw.1} parent=0 // pred_check_branch
    %25 = sbr.rel (0) target = $region29
  $region28: #{fused_se_conv_bn_nchw.1} parent=0 // pred_region
    _
  $region29: #{fused_se_conv_bn_nchw.1} parent=0 // pred_fallthru
    _
  %v27 = vld [vmem:[%s0] sm:$0x1]
  %v28 = vpack.c.bf16 %v27, %v27
  %v29 = vld [vmem:[%s1] sm:$0xff]
  %v30 = vld [vmem:[%s1 + $0x8] sm:$0xff]
  %v31 = vld [vmem:[%s1 + $0x10] sm:$0xff]
  %v32 = vld [vmem:[%s1 + $0x18] sm:$0xff]
  %v33 = vld [vmem:[%s1 + $0x20] sm:$0xff]
  %v34 = vld [vmem:[%s1 + $0x28] sm:$0xff]
  %v35 = vld [vmem:[%s1 + $0x30] sm:$0xff]
  %v36 = vld [vmem:[%s1 + $0x38] sm:$0xff]
  %v37 = vld [vmem:[%s2] sm:$0xf]
  %v46 = vunpack.c.l.b16 %v29
  %v47 = vunpack.c.h.b16 %v29
  %v48 = vunpack.c.l.b16 %v30
  %v49 = vunpack.c.h.b16 %v30
  %v50 = vunpack.c.l.b16 %v31
  %v51 = vunpack.c.h.b16 %v31
  %v52 = vunpack.c.l.b16 %v32
  %v53 = vunpack.c.h.b16 %v32
  %v54 = vunpack.c.l.b16 %v33
  %v55 = vunpack.c.h.b16 %v33
  %v56 = vunpack.c.l.b16 %v34
  %v57 = vunpack.c.h.b16 %v34
  %v58 = vunpack.c.l.b16 %v35
  %v59 = vunpack.c.h.b16 %v35
  %v60 = vunpack.c.l.b16 %v36
  %v61 = vunpack.c.h.b16 %v36
  %v62 = vpack.c.b16 %v50, %v46
  %v63 = vpack.c.b16 %v51, %v47
  %v64 = vpack.c.b16 %v52, %v48
  %v65 = vpack.c.b16 %v53, %v49
  %v66 = vpack.c.b16 %v58, %v54
  %v67 = vpack.c.b16 %v59, %v55
  %v68 = vpack.c.b16 %v60, %v56
  %v69 = vpack.c.b16 %v61, %v57
  %v79 = vperm.slane %v37, 0
  %v80 = vperm.slane %v37, 1
  %v81 = vperm.slane %v37, 2
  %v82 = vperm.slane %v37, 3
  %vm87 = vcmask 261120
  %v89 = vsel %vm87, %v28, 0
  %91 = vmatpush.bf16.msra.mxu0 0
  %92 = vmatpush.bf16.msra.mxu0 0
  %93 = vmatpush.bf16.msra.mxu0 0
  %94 = vmatpush.bf16.msra.mxu0 0
  %95 = vmatpush.bf16.msra.mxu0 0
  %96 = vmatpush.bf16.msra.mxu0 0
  %97 = vmatpush.bf16.msra.mxu0 %v66
  %98 = vmatpush.bf16.msra.mxu0 %v62
  %99 = vmatmul.bf16.gmra.mxu0 %v89
  %v100 = vpop.f32.mrf.mxu0
  %v101 = vadd.f32 %v79, %v100
  %v102 = vpop.f32.mrf.mxu0
  %103 = vdwg.mxu0
  %104 = vmatpush.bf16.msra.mxu0 0
  %105 = vmatpush.bf16.msra.mxu0 0
  %106 = vmatpush.bf16.msra.mxu0 0
  %107 = vmatpush.bf16.msra.mxu0 0
  %108 = vmatpush.bf16.msra.mxu0 0
  %109 = vmatpush.bf16.msra.mxu0 0
  %110 = vmatpush.bf16.msra.mxu0 %v67
  %111 = vmatpush.bf16.msra.mxu0 %v63
  %112 = vmatmul.bf16.gmra.mxu0 %v89
  %v113 = vpop.f32.mrf.mxu0
  %v114 = vadd.f32 %v80, %v113
  %v115 = vpop.f32.mrf.mxu0
  %116 = vdwg.mxu0
  %117 = vmatpush.bf16.msra.mxu0 0
  %118 = vmatpush.bf16.msra.mxu0 0
  %119 = vmatpush.bf16.msra.mxu0 0
  %120 = vmatpush.bf16.msra.mxu0 0
  %121 = vmatpush.bf16.msra.mxu0 0
  %122 = vmatpush.bf16.msra.mxu0 0
  %123 = vmatpush.bf16.msra.mxu0 %v68
  %124 = vmatpush.bf16.msra.mxu0 %v64
  %125 = vmatmul.bf16.gmra.mxu0 %v89
  %v126 = vpop.f32.mrf.mxu0
  %v127 = vadd.f32 %v81, %v126
  %v128 = vpop.f32.mrf.mxu0
  %129 = vdwg.mxu0
  %130 = vmatpush.bf16.msra.mxu0 0
  %131 = vmatpush.bf16.msra.mxu0 0
  %132 = vmatpush.bf16.msra.mxu0 0
  %133 = vmatpush.bf16.msra.mxu0 0
  %134 = vmatpush.bf16.msra.mxu0 0
  %135 = vmatpush.bf16.msra.mxu0 0
  %136 = vmatpush.bf16.msra.mxu0 %v69
  %137 = vmatpush.bf16.msra.mxu0 %v65
  %138 = vmatmul.bf16.gmra.mxu0 %v89
  %v139 = vpop.f32.mrf.mxu0
  %v140 = vadd.f32 %v82, %v139
  %v141 = vpop.f32.mrf.mxu0
  %142 = vdwg.mxu0
  %v143 = vxor.u32 %v101, 2147483648
  %v144 = vxor.u32 %v114, 2147483648
  %v145 = vxor.u32 %v127, 2147483648
  %v146 = vxor.u32 %v140, 2147483648
  %v147 = vmul.f32 %v143, 1.442695
  %v148 = vpow.pop %v147
  %v149 = vmul.f32 %v144, 1.442695
  %v150 = vpow.pop %v149
  %v151 = vmul.f32 %v145, 1.442695
  %v152 = vpow.pop %v151
  %v153 = vmul.f32 %v146, 1.442695
  %v154 = vpow.pop %v153
  %v155 = vadd.f32 %v148, 1.0
  %v156 = vadd.f32 %v150, 1.0
  %v157 = vadd.f32 %v152, 1.0
  %v158 = vadd.f32 %v154, 1.0
  %v159 = vrcp.pop %v155
  %v160 = vmul.f32 %v155, %v159
  %v161 = vsub.f32 1.0, %v160
  %v162 = vmul.f32 %v159, %v161
  %v163 = vadd.f32 %v159, %v162
  %vm164 = vweird.f32 %v155
  %vm165 = vweird.f32 %v159
  %vm166 = vmor %vm164, %vm165
  %v167 = vsel %vm166, %v159, %v163
  %v168 = vand.u32 2147483647, %v155
  %vm169 = vcmp.eq.f32.partialorder %v168, 8.507059e+37
  %v170 = vand.u32 %v155, 2147483648
  %v171 = vor.u32 1.1754944e-38, %v170
  %v172 = vsel %vm169, %v171, %v167
  %v173 = vmul.f32 1.0, %v172
  %v174 = vrcp.pop %v156
  %v175 = vmul.f32 %v156, %v174
  %v176 = vsub.f32 1.0, %v175
  %v177 = vmul.f32 %v174, %v176
  %v178 = vadd.f32 %v174, %v177
  %vm179 = vweird.f32 %v156
  %vm180 = vweird.f32 %v174
  %vm181 = vmor %vm179, %vm180
  %v182 = vsel %vm181, %v174, %v178
  %v183 = vand.u32 2147483647, %v156
  %vm184 = vcmp.eq.f32.partialorder %v183, 8.507059e+37
  %v185 = vand.u32 %v156, 2147483648
  %v186 = vor.u32 1.1754944e-38, %v185
  %v187 = vsel %vm184, %v186, %v182
  %v188 = vmul.f32 1.0, %v187
  %v189 = vrcp.pop %v157
  %v190 = vmul.f32 %v157, %v189
  %v191 = vsub.f32 1.0, %v190
  %v192 = vmul.f32 %v189, %v191
  %v193 = vadd.f32 %v189, %v192
  %vm194 = vweird.f32 %v157
  %vm195 = vweird.f32 %v189
  %vm196 = vmor %vm194, %vm195
  %v197 = vsel %vm196, %v189, %v193
  %v198 = vand.u32 2147483647, %v157
  %vm199 = vcmp.eq.f32.partialorder %v198, 8.507059e+37
  %v200 = vand.u32 %v157, 2147483648
  %v201 = vor.u32 1.1754944e-38, %v200
  %v202 = vsel %vm199, %v201, %v197
  %v203 = vmul.f32 1.0, %v202
  %v204 = vrcp.pop %v158
  %v205 = vmul.f32 %v158, %v204
  %v206 = vsub.f32 1.0, %v205
  %v207 = vmul.f32 %v204, %v206
  %v208 = vadd.f32 %v204, %v207
  %vm209 = vweird.f32 %v158
  %vm210 = vweird.f32 %v204
  %vm211 = vmor %vm209, %vm210
  %v212 = vsel %vm211, %v204, %v208
  %v213 = vand.u32 2147483647, %v158
  %vm214 = vcmp.eq.f32.partialorder %v213, 8.507059e+37
  %v215 = vand.u32 %v158, 2147483648
  %v216 = vor.u32 1.1754944e-38, %v215
  %v217 = vsel %vm214, %v216, %v212
  %v218 = vmul.f32 1.0, %v217
  %v219 = vld [vmem:[%s3] sm:$0xff]
  %v220 = vld [vmem:[%s3 + $0x8] sm:$0xff]
  %v221 = vld [vmem:[%s3 + $0x10] sm:$0xff]
  %v222 = vld [vmem:[%s3 + $0x18] sm:$0xff]
  %v223 = vld [vmem:[%s3 + $0x20] sm:$0xff]
  %v224 = vld [vmem:[%s3 + $0x28] sm:$0xff]
  %v225 = vld [vmem:[%s3 + $0x30] sm:$0xff]
  %v226 = vld [vmem:[%s3 + $0x38] sm:$0xff]
  %v227 = vld [vmem:[%s3 + $0x40] sm:$0xff]
  %v228 = vld [vmem:[%s3 + $0x48] sm:$0xff]
  %v229 = vld [vmem:[%s3 + $0x50] sm:$0xff]
  %v230 = vld [vmem:[%s3 + $0x58] sm:$0xff]
  %v231 = vld [vmem:[%s3 + $0x60] sm:$0xff]
  %v232 = vld [vmem:[%s3 + $0x68] sm:$0xff]
  %v233 = vld [vmem:[%s3 + $0x70] sm:$0xff]
  %v234 = vld [vmem:[%s3 + $0x78] sm:$0xff]
  %v235 = vld [vmem:[%s3 + $0x80] sm:$0xff]
  %v236 = vld [vmem:[%s3 + $0x88] sm:$0xff]
  %v237 = vld [vmem:[%s3 + $0x90] sm:$0xff]
  %v238 = vld [vmem:[%s3 + $0x98] sm:$0xff]
  %v239 = vld [vmem:[%s3 + $0xa0] sm:$0xff]
  %v240 = vld [vmem:[%s3 + $0xa8] sm:$0xff]
  %v241 = vld [vmem:[%s3 + $0xb0] sm:$0xff]
  %v242 = vld [vmem:[%s3 + $0xb8] sm:$0xff]
  %v243 = vld [vmem:[%s3 + $0xc0] sm:$0xff]
  %v244 = vld [vmem:[%s3 + $0xc8] sm:$0xff]
  %v245 = vld [vmem:[%s3 + $0xd0] sm:$0xff]
  %v246 = vld [vmem:[%s3 + $0xd8] sm:$0xff]
  %v247 = vld [vmem:[%s3 + $0xe0] sm:$0xff]
  %v248 = vld [vmem:[%s3 + $0xe8] sm:$0xff]
  %v249 = vld [vmem:[%s3 + $0xf0] sm:$0xff]
  %v250 = vld [vmem:[%s3 + $0xf8] sm:$0xff]
  %v251 = vld [vmem:[%s3 + $0x100] sm:$0xff]
  %v252 = vld [vmem:[%s3 + $0x108] sm:$0xff]
  %v253 = vld [vmem:[%s3 + $0x110] sm:$0xff]
  %v254 = vld [vmem:[%s3 + $0x118] sm:$0xff]
  %v255 = vld [vmem:[%s3 + $0x120] sm:$0xff]
  %v256 = vld [vmem:[%s3 + $0x128] sm:$0xff]
  %v257 = vld [vmem:[%s3 + $0x130] sm:$0xff]
  %v258 = vld [vmem:[%s3 + $0x138] sm:$0xff]
  %v259 = vld [vmem:[%s3 + $0x140] sm:$0xff]
  %v260 = vld [vmem:[%s3 + $0x148] sm:$0xff]
  %v261 = vld [vmem:[%s3 + $0x150] sm:$0xff]
  %v262 = vld [vmem:[%s3 + $0x158] sm:$0xff]
  %v263 = vld [vmem:[%s3 + $0x160] sm:$0xff]
  %v264 = vld [vmem:[%s3 + $0x168] sm:$0xff]
  %v265 = vld [vmem:[%s3 + $0x170] sm:$0xff]
  %v266 = vld [vmem:[%s3 + $0x178] sm:$0xff]
  %v267 = vld [vmem:[%s3 + $0x180] sm:$0xff]
  %v268 = vld [vmem:[%s3 + $0x188] sm:$0xff]
  %v269 = vld [vmem:[%s3 + $0x190] sm:$0xff]
  %v270 = vld [vmem:[%s3 + $0x198] sm:$0xff]
  %v271 = vld [vmem:[%s3 + $0x1a0] sm:$0xff]
  %v272 = vld [vmem:[%s3 + $0x1a8] sm:$0xff]
  %v273 = vld [vmem:[%s3 + $0x1b0] sm:$0xff]
  %v274 = vld [vmem:[%s3 + $0x1b8] sm:$0xff]
  %v275 = vld [vmem:[%s3 + $0x1c0] sm:$0xff]
  %v276 = vld [vmem:[%s3 + $0x1c8] sm:$0xff]
  %v277 = vld [vmem:[%s3 + $0x1d0] sm:$0xff]
  %v278 = vld [vmem:[%s3 + $0x1d8] sm:$0xff]
  %v279 = vld [vmem:[%s3 + $0x1e0] sm:$0xff]
  %v280 = vld [vmem:[%s3 + $0x1e8] sm:$0xff]
  %v281 = vld [vmem:[%s3 + $0x1f0] sm:$0xff]
  %v282 = vld [vmem:[%s3 + $0x1f8] sm:$0xff]
  %283 = vxpose.xlu0.b32.start [1/16] %v219, 128
  %284 = vxpose.xlu0.b32.cont [2/16] %v220, 128
  %285 = vxpose.xlu0.b32.cont [3/16] %v221, 128
  %286 = vxpose.xlu0.b32.cont [4/16] %v222, 128
  %287 = vxpose.xlu0.b32.cont [5/16] %v223, 128
  %288 = vxpose.xlu0.b32.cont [6/16] %v224, 128
  %289 = vxpose.xlu0.b32.cont [7/16] %v225, 128
  %290 = vxpose.xlu0.b32.cont [8/16] %v226, 128
  %291 = vxpose.xlu0.b32.cont [9/16] %v227, 128
  %292 = vxpose.xlu0.b32.cont [10/16] %v228, 128
  %293 = vxpose.xlu0.b32.cont [11/16] %v229, 128
  %294 = vxpose.xlu0.b32.cont [12/16] %v230, 128
  %295 = vxpose.xlu0.b32.cont [13/16] %v231, 128
  %296 = vxpose.xlu0.b32.cont [14/16] %v232, 128
  %297 = vxpose.xlu0.b32.cont [15/16] %v233, 128
  %298 = vxpose.xlu0.b32.end [16/16] %v234, 128
  %v299 = vpop.trf.xlu0
  %v300 = vpop.trf.xlu0
  %v301 = vpop.trf.xlu0
  %v302 = vpop.trf.xlu0
  %v303 = vpop.trf.xlu0
  %v304 = vpop.trf.xlu0
  %v305 = vpop.trf.xlu0
  %v306 = vpop.trf.xlu0
  %v307 = vpop.trf.xlu0
  %v308 = vpop.trf.xlu0
  %v309 = vpop.trf.xlu0
  %v310 = vpop.trf.xlu0
  %v311 = vpop.trf.xlu0
  %v312 = vpop.trf.xlu0
  %v313 = vpop.trf.xlu0
  %v314 = vpop.trf.xlu0
  %315 = vxpose.xlu0.b32.start [1/16] %v235, 128
  %316 = vxpose.xlu0.b32.cont [2/16] %v236, 128
  %317 = vxpose.xlu0.b32.cont [3/16] %v237, 128
  %318 = vxpose.xlu0.b32.cont [4/16] %v238, 128
  %319 = vxpose.xlu0.b32.cont [5/16] %v239, 128
  %320 = vxpose.xlu0.b32.cont [6/16] %v240, 128
  %321 = vxpose.xlu0.b32.cont [7/16] %v241, 128
  %322 = vxpose.xlu0.b32.cont [8/16] %v242, 128
  %323 = vxpose.xlu0.b32.cont [9/16] %v243, 128
  %324 = vxpose.xlu0.b32.cont [10/16] %v244, 128
  %325 = vxpose.xlu0.b32.cont [11/16] %v245, 128
  %326 = vxpose.xlu0.b32.cont [12/16] %v246, 128
  %327 = vxpose.xlu0.b32.cont [13/16] %v247, 128
  %328 = vxpose.xlu0.b32.cont [14/16] %v248, 128
  %329 = vxpose.xlu0.b32.cont [15/16] %v249, 128
  %330 = vxpose.xlu0.b32.end [16/16] %v250, 128
  %v331 = vpop.trf.xlu0
  %v332 = vpop.trf.xlu0
  %v333 = vpop.trf.xlu0
  %v334 = vpop.trf.xlu0
  %v335 = vpop.trf.xlu0
  %v336 = vpop.trf.xlu0
  %v337 = vpop.trf.xlu0
  %v338 = vpop.trf.xlu0
  %v339 = vpop.trf.xlu0
  %v340 = vpop.trf.xlu0
  %v341 = vpop.trf.xlu0
  %v342 = vpop.trf.xlu0
  %v343 = vpop.trf.xlu0
  %v344 = vpop.trf.xlu0
  %v345 = vpop.trf.xlu0
  %v346 = vpop.trf.xlu0
  %347 = vxpose.xlu0.b32.start [1/16] %v251, 128
  %348 = vxpose.xlu0.b32.cont [2/16] %v252, 128
  %349 = vxpose.xlu0.b32.cont [3/16] %v253, 128
  %350 = vxpose.xlu0.b32.cont [4/16] %v254, 128
  %351 = vxpose.xlu0.b32.cont [5/16] %v255, 128
  %352 = vxpose.xlu0.b32.cont [6/16] %v256, 128
  %353 = vxpose.xlu0.b32.cont [7/16] %v257, 128
  %354 = vxpose.xlu0.b32.cont [8/16] %v258, 128
  %355 = vxpose.xlu0.b32.cont [9/16] %v259, 128
  %356 = vxpose.xlu0.b32.cont [10/16] %v260, 128
  %357 = vxpose.xlu0.b32.cont [11/16] %v261, 128
  %358 = vxpose.xlu0.b32.cont [12/16] %v262, 128
  %359 = vxpose.xlu0.b32.cont [13/16] %v263, 128
  %360 = vxpose.xlu0.b32.cont [14/16] %v264, 128
  %361 = vxpose.xlu0.b32.cont [15/16] %v265, 128
  %362 = vxpose.xlu0.b32.end [16/16] %v266, 128
  %v363 = vpop.trf.xlu0
  %v364 = vpop.trf.xlu0
  %v365 = vpop.trf.xlu0
  %v366 = vpop.trf.xlu0
  %v367 = vpop.trf.xlu0
  %v368 = vpop.trf.xlu0
  %v369 = vpop.trf.xlu0
  %v370 = vpop.trf.xlu0
  %v371 = vpop.trf.xlu0
  %v372 = vpop.trf.xlu0
  %v373 = vpop.trf.xlu0
  %v374 = vpop.trf.xlu0
  %v375 = vpop.trf.xlu0
  %v376 = vpop.trf.xlu0
  %v377 = vpop.trf.xlu0
  %v378 = vpop.trf.xlu0
  %379 = vxpose.xlu0.b32.start [1/16] %v267, 128
  %380 = vxpose.xlu0.b32.cont [2/16] %v268, 128
  %381 = vxpose.xlu0.b32.cont [3/16] %v269, 128
  %382 = vxpose.xlu0.b32.cont [4/16] %v270, 128
  %383 = vxpose.xlu0.b32.cont [5/16] %v271, 128
  %384 = vxpose.xlu0.b32.cont [6/16] %v272, 128
  %385 = vxpose.xlu0.b32.cont [7/16] %v273, 128
  %386 = vxpose.xlu0.b32.cont [8/16] %v274, 128
  %387 = vxpose.xlu0.b32.cont [9/16] %v275, 128
  %388 = vxpose.xlu0.b32.cont [10/16] %v276, 128
  %389 = vxpose.xlu0.b32.cont [11/16] %v277, 128
  %390 = vxpose.xlu0.b32.cont [12/16] %v278, 128
  %391 = vxpose.xlu0.b32.cont [13/16] %v279, 128
  %392 = vxpose.xlu0.b32.cont [14/16] %v280, 128
  %393 = vxpose.xlu0.b32.cont [15/16] %v281, 128
  %394 = vxpose.xlu0.b32.end [16/16] %v282, 128
  %v395 = vpop.trf.xlu0
  %v396 = vpop.trf.xlu0
  %v397 = vpop.trf.xlu0
  %v398 = vpop.trf.xlu0
  %v399 = vpop.trf.xlu0
  %v400 = vpop.trf.xlu0
  %v401 = vpop.trf.xlu0
  %v402 = vpop.trf.xlu0
  %v403 = vpop.trf.xlu0
  %v404 = vpop.trf.xlu0
  %v405 = vpop.trf.xlu0
  %v406 = vpop.trf.xlu0
  %v407 = vpop.trf.xlu0
  %v408 = vpop.trf.xlu0
  %v409 = vpop.trf.xlu0
  %v410 = vpop.trf.xlu0
  %v411 = vperm.slane %v173, 0
  %v412 = vperm.slane %v188, 0
  %v413 = vperm.slane %v203, 0
  %v414 = vperm.slane %v218, 0
  %v415 = vmul.f32 %v299, %v411
  %v416 = vmul.f32 %v331, %v412
  %v417 = vmul.f32 %v363, %v413
  %v418 = vmul.f32 %v395, %v414
  %v419 = vmul.f32 %v300, %v411
  %v420 = vmul.f32 %v332, %v412
  %v421 = vmul.f32 %v364, %v413
  %v422 = vmul.f32 %v396, %v414
  %v423 = vmul.f32 %v301, %v411
  %v424 = vmul.f32 %v333, %v412
  %v425 = vmul.f32 %v365, %v413
  %v426 = vmul.f32 %v397, %v414
  %v427 = vmul.f32 %v302, %v411
  %v428 = vmul.f32 %v334, %v412
  %v429 = vmul.f32 %v366, %v413
  %v430 = vmul.f32 %v398, %v414
  %v431 = vmul.f32 %v303, %v411
  %v432 = vmul.f32 %v335, %v412
  %v433 = vmul.f32 %v367, %v413
  %v434 = vmul.f32 %v399, %v414
  %v435 = vmul.f32 %v304, %v411
  %v436 = vmul.f32 %v336, %v412
  %v437 = vmul.f32 %v368, %v413
  %v438 = vmul.f32 %v400, %v414
  %v439 = vmul.f32 %v305, %v411
  %v440 = vmul.f32 %v337, %v412
  %v441 = vmul.f32 %v369, %v413
  %v442 = vmul.f32 %v401, %v414
  %v443 = vpack.c.bf16 %v419, %v415
  %v444 = vpack.c.bf16 %v420, %v416
  %v445 = vpack.c.bf16 %v421, %v417
  %v446 = vpack.c.bf16 %v422, %v418
  %v447 = vpack.c.bf16 %v427, %v423
  %v448 = vpack.c.bf16 %v428, %v424
  %v449 = vpack.c.bf16 %v429, %v425
  %v450 = vpack.c.bf16 %v430, %v426
  %v451 = vpack.c.bf16 %v435, %v431
  %v452 = vpack.c.bf16 %v436, %v432
  %v453 = vpack.c.bf16 %v437, %v433
  %v454 = vpack.c.bf16 %v438, %v434
  %v455 = vpack.c.bf16 %v439, %v439
  %v456 = vpack.c.bf16 %v440, %v440
  %v457 = vpack.c.bf16 %v441, %v441
  %v458 = vpack.c.bf16 %v442, %v442
  %v459 = vld [vmem:[%s4] sm:$0xff]
  %v460 = vld [vmem:[%s4 + $0x8] sm:$0xff]
  %v461 = vld [vmem:[%s4 + $0x10] sm:$0xff]
  %v462 = vld [vmem:[%s4 + $0x18] sm:$0xff]
  %v463 = vld [vmem:[%s4 + $0x20] sm:$0xff]
  %v464 = vld [vmem:[%s4 + $0x28] sm:$0xff]
  %v465 = vld [vmem:[%s4 + $0x30] sm:$0xff]
  %v466 = vld [vmem:[%s4 + $0x38] sm:$0xff]
  %v467 = vld [vmem:[%s4 + $0x40] sm:$0xff]
  %v468 = vld [vmem:[%s4 + $0x48] sm:$0xff]
  %v469 = vld [vmem:[%s4 + $0x50] sm:$0xff]
  %v470 = vld [vmem:[%s4 + $0x58] sm:$0xff]
  %v471 = vld [vmem:[%s4 + $0x60] sm:$0xff]
  %v472 = vld [vmem:[%s4 + $0x68] sm:$0xff]
  %v473 = vld [vmem:[%s4 + $0x70] sm:$0xff]
  %v474 = vld [vmem:[%s4 + $0x78] sm:$0xff]
  %v475 = vld [vmem:[%s4 + $0x80] sm:$0xff]
  %v476 = vld [vmem:[%s4 + $0x88] sm:$0xff]
  %v477 = vld [vmem:[%s4 + $0x90] sm:$0xff]
  %v478 = vld [vmem:[%s4 + $0x98] sm:$0xff]
  %v479 = vld [vmem:[%s4 + $0xa0] sm:$0xff]
  %v480 = vld [vmem:[%s4 + $0xa8] sm:$0xff]
  %v481 = vld [vmem:[%s4 + $0xb0] sm:$0xff]
  %v482 = vld [vmem:[%s4 + $0xb8] sm:$0xff]
  %v483 = vld [vmem:[%s4 + $0xc0] sm:$0xff]
  %v484 = vld [vmem:[%s4 + $0xc8] sm:$0xff]
  %v485 = vld [vmem:[%s4 + $0xd0] sm:$0xff]
  %v486 = vld [vmem:[%s4 + $0xd8] sm:$0xff]
  %v487 = vld [vmem:[%s4 + $0xe0] sm:$0xff]
  %v488 = vld [vmem:[%s4 + $0xe8] sm:$0xff]
  %v489 = vld [vmem:[%s4 + $0xf0] sm:$0xff]
  %v490 = vld [vmem:[%s4 + $0xf8] sm:$0xff]
  %v491 = vld [vmem:[%s4 + $0x100] sm:$0xff]
  %v492 = vld [vmem:[%s4 + $0x108] sm:$0xff]
  %v493 = vld [vmem:[%s4 + $0x110] sm:$0xff]
  %v494 = vld [vmem:[%s4 + $0x118] sm:$0xff]
  %v495 = vld [vmem:[%s4 + $0x120] sm:$0xff]
  %v496 = vld [vmem:[%s4 + $0x128] sm:$0xff]
  %v497 = vld [vmem:[%s4 + $0x130] sm:$0xff]
  %v498 = vld [vmem:[%s4 + $0x138] sm:$0xff]
  %v499 = vld [vmem:[%s4 + $0x140] sm:$0xff]
  %v500 = vld [vmem:[%s4 + $0x148] sm:$0xff]
  %v501 = vld [vmem:[%s4 + $0x150] sm:$0xff]
  %v502 = vld [vmem:[%s4 + $0x158] sm:$0xff]
  %v503 = vld [vmem:[%s4 + $0x160] sm:$0xff]
  %v504 = vld [vmem:[%s4 + $0x168] sm:$0xff]
  %v505 = vld [vmem:[%s4 + $0x170] sm:$0xff]
  %v506 = vld [vmem:[%s4 + $0x178] sm:$0xff]
  %v507 = vld [vmem:[%s4 + $0x180] sm:$0xff]
  %v508 = vld [vmem:[%s4 + $0x188] sm:$0xff]
  %v509 = vld [vmem:[%s4 + $0x190] sm:$0xff]
  %v510 = vld [vmem:[%s4 + $0x198] sm:$0xff]
  %v511 = vld [vmem:[%s4 + $0x1a0] sm:$0xff]
  %v512 = vld [vmem:[%s4 + $0x1a8] sm:$0xff]
  %v513 = vld [vmem:[%s4 + $0x1b0] sm:$0xff]
  %v514 = vld [vmem:[%s4 + $0x1b8] sm:$0xff]
  %v515 = vld [vmem:[%s4 + $0x1c0] sm:$0xff]
  %v516 = vld [vmem:[%s4 + $0x1c8] sm:$0xff]
  %v517 = vld [vmem:[%s4 + $0x1d0] sm:$0xff]
  %v518 = vld [vmem:[%s4 + $0x1d8] sm:$0xff]
  %v519 = vld [vmem:[%s4 + $0x1e0] sm:$0xff]
  %v520 = vld [vmem:[%s4 + $0x1e8] sm:$0xff]
  %v521 = vld [vmem:[%s4 + $0x1f0] sm:$0xff]
  %v522 = vld [vmem:[%s4 + $0x1f8] sm:$0xff]
  %v587 = vunpack.c.l.b16 %v459
  %v588 = vunpack.c.h.b16 %v459
  %v589 = vunpack.c.l.b16 %v460
  %v590 = vunpack.c.h.b16 %v460
  %v591 = vunpack.c.l.b16 %v461
  %v592 = vunpack.c.h.b16 %v461
  %v593 = vunpack.c.l.b16 %v462
  %v594 = vunpack.c.h.b16 %v462
  %v595 = vunpack.c.l.b16 %v463
  %v596 = vunpack.c.h.b16 %v463
  %v597 = vunpack.c.l.b16 %v464
  %v598 = vunpack.c.h.b16 %v464
  %v599 = vunpack.c.l.b16 %v465
  %v600 = vunpack.c.h.b16 %v465
  %v601 = vunpack.c.l.b16 %v466
  %v602 = vunpack.c.h.b16 %v466
  %v603 = vunpack.c.l.b16 %v467
  %v604 = vunpack.c.h.b16 %v467
  %v605 = vunpack.c.l.b16 %v468
  %v606 = vunpack.c.h.b16 %v468
  %v607 = vunpack.c.l.b16 %v469
  %v608 = vunpack.c.h.b16 %v469
  %v609 = vunpack.c.l.b16 %v470
  %v610 = vunpack.c.h.b16 %v470
  %v611 = vunpack.c.l.b16 %v471
  %v612 = vunpack.c.h.b16 %v471
  %v613 = vunpack.c.l.b16 %v472
  %v614 = vunpack.c.h.b16 %v472
  %v615 = vunpack.c.l.b16 %v473
  %v616 = vunpack.c.h.b16 %v473
  %v617 = vunpack.c.l.b16 %v474
  %v618 = vunpack.c.h.b16 %v474
  %v619 = vunpack.c.l.b16 %v475
  %v620 = vunpack.c.h.b16 %v475
  %v621 = vunpack.c.l.b16 %v476
  %v622 = vunpack.c.h.b16 %v476
  %v623 = vunpack.c.l.b16 %v477
  %v624 = vunpack.c.h.b16 %v477
  %v625 = vunpack.c.l.b16 %v478
  %v626 = vunpack.c.h.b16 %v478
  %v627 = vunpack.c.l.b16 %v479
  %v628 = vunpack.c.h.b16 %v479
  %v629 = vunpack.c.l.b16 %v480
  %v630 = vunpack.c.h.b16 %v480
  %v631 = vunpack.c.l.b16 %v481
  %v632 = vunpack.c.h.b16 %v481
  %v633 = vunpack.c.l.b16 %v482
  %v634 = vunpack.c.h.b16 %v482
  %v635 = vunpack.c.l.b16 %v483
  %v636 = vunpack.c.h.b16 %v483
  %v637 = vunpack.c.l.b16 %v484
  %v638 = vunpack.c.h.b16 %v484
  %v639 = vunpack.c.l.b16 %v485
  %v640 = vunpack.c.h.b16 %v485
  %v641 = vunpack.c.l.b16 %v486
  %v642 = vunpack.c.h.b16 %v486
  %v643 = vunpack.c.l.b16 %v487
  %v644 = vunpack.c.h.b16 %v487
  %v645 = vunpack.c.l.b16 %v488
  %v646 = vunpack.c.h.b16 %v488
  %v647 = vunpack.c.l.b16 %v489
  %v648 = vunpack.c.h.b16 %v489
  %v649 = vunpack.c.l.b16 %v490
  %v650 = vunpack.c.h.b16 %v490
  %v651 = vunpack.c.l.b16 %v491
  %v652 = vunpack.c.h.b16 %v491
  %v653 = vunpack.c.l.b16 %v492
  %v654 = vunpack.c.h.b16 %v492
  %v655 = vunpack.c.l.b16 %v493
  %v656 = vunpack.c.h.b16 %v493
  %v657 = vunpack.c.l.b16 %v494
  %v658 = vunpack.c.h.b16 %v494
  %v659 = vunpack.c.l.b16 %v495
  %v660 = vunpack.c.h.b16 %v495
  %v661 = vunpack.c.l.b16 %v496
  %v662 = vunpack.c.h.b16 %v496
  %v663 = vunpack.c.l.b16 %v497
  %v664 = vunpack.c.h.b16 %v497
  %v665 = vunpack.c.l.b16 %v498
  %v666 = vunpack.c.h.b16 %v498
  %v667 = vunpack.c.l.b16 %v499
  %v668 = vunpack.c.h.b16 %v499
  %v669 = vunpack.c.l.b16 %v500
  %v670 = vunpack.c.h.b16 %v500
  %v671 = vunpack.c.l.b16 %v501
  %v672 = vunpack.c.h.b16 %v501
  %v673 = vunpack.c.l.b16 %v502
  %v674 = vunpack.c.h.b16 %v502
  %v675 = vunpack.c.l.b16 %v503
  %v676 = vunpack.c.h.b16 %v503
  %v677 = vunpack.c.l.b16 %v504
  %v678 = vunpack.c.h.b16 %v504
  %v679 = vunpack.c.l.b16 %v505
  %v680 = vunpack.c.h.b16 %v505
  %v681 = vunpack.c.l.b16 %v506
  %v682 = vunpack.c.h.b16 %v506
  %v683 = vunpack.c.l.b16 %v507
  %v684 = vunpack.c.h.b16 %v507
  %v685 = vunpack.c.l.b16 %v508
  %v686 = vunpack.c.h.b16 %v508
  %v687 = vunpack.c.l.b16 %v509
  %v688 = vunpack.c.h.b16 %v509
  %v689 = vunpack.c.l.b16 %v510
  %v690 = vunpack.c.h.b16 %v510
  %v691 = vunpack.c.l.b16 %v511
  %v692 = vunpack.c.h.b16 %v511
  %v693 = vunpack.c.l.b16 %v512
  %v694 = vunpack.c.h.b16 %v512
  %v695 = vunpack.c.l.b16 %v513
  %v696 = vunpack.c.h.b16 %v513
  %v697 = vunpack.c.l.b16 %v514
  %v698 = vunpack.c.h.b16 %v514
  %v699 = vunpack.c.l.b16 %v515
  %v700 = vunpack.c.h.b16 %v515
  %v701 = vunpack.c.l.b16 %v516
  %v702 = vunpack.c.h.b16 %v516
  %v703 = vunpack.c.l.b16 %v517
  %v704 = vunpack.c.h.b16 %v517
  %v705 = vunpack.c.l.b16 %v518
  %v706 = vunpack.c.h.b16 %v518
  %v707 = vunpack.c.l.b16 %v519
  %v708 = vunpack.c.h.b16 %v519
  %v709 = vunpack.c.l.b16 %v520
  %v710 = vunpack.c.h.b16 %v520
  %v711 = vunpack.c.l.b16 %v521
  %v712 = vunpack.c.h.b16 %v521
  %v713 = vunpack.c.l.b16 %v522
  %v714 = vunpack.c.h.b16 %v522
  %v715 = vpack.c.b16 %v589, %v587
  %v716 = vpack.c.b16 %v590, %v588
  %v717 = vpack.c.b16 %v593, %v591
  %v718 = vpack.c.b16 %v594, %v592
  %v719 = vpack.c.b16 %v597, %v595
  %v720 = vpack.c.b16 %v598, %v596
  %v721 = vpack.c.b16 %v601, %v599
  %v722 = vpack.c.b16 %v602, %v600
  %v723 = vpack.c.b16 %v605, %v603
  %v724 = vpack.c.b16 %v606, %v604
  %v725 = vpack.c.b16 %v609, %v607
  %v726 = vpack.c.b16 %v610, %v608
  %v727 = vpack.c.b16 %v613, %v611
  %v728 = vpack.c.b16 %v614, %v612
  %v729 = vpack.c.b16 %v617, %v615
  %v730 = vpack.c.b16 %v618, %v616
  %v731 = vpack.c.b16 %v621, %v619
  %v732 = vpack.c.b16 %v622, %v620
  %v733 = vpack.c.b16 %v625, %v623
  %v734 = vpack.c.b16 %v626, %v624
  %v735 = vpack.c.b16 %v629, %v627
  %v736 = vpack.c.b16 %v630, %v628
  %v737 = vpack.c.b16 %v633, %v631
  %v738 = vpack.c.b16 %v634, %v632
  %v739 = vpack.c.b16 %v637, %v635
  %v740 = vpack.c.b16 %v638, %v636
  %v741 = vpack.c.b16 %v641, %v639
  %v742 = vpack.c.b16 %v642, %v640
  %v743 = vpack.c.b16 %v645, %v643
  %v744 = vpack.c.b16 %v646, %v644
  %v745 = vpack.c.b16 %v649, %v647
  %v746 = vpack.c.b16 %v650, %v648
  %v747 = vpack.c.b16 %v653, %v651
  %v748 = vpack.c.b16 %v654, %v652
  %v749 = vpack.c.b16 %v657, %v655
  %v750 = vpack.c.b16 %v658, %v656
  %v751 = vpack.c.b16 %v661, %v659
  %v752 = vpack.c.b16 %v662, %v660
  %v753 = vpack.c.b16 %v665, %v663
  %v754 = vpack.c.b16 %v666, %v664
  %v755 = vpack.c.b16 %v669, %v667
  %v756 = vpack.c.b16 %v670, %v668
  %v757 = vpack.c.b16 %v673, %v671
  %v758 = vpack.c.b16 %v674, %v672
  %v759 = vpack.c.b16 %v677, %v675
  %v760 = vpack.c.b16 %v678, %v676
  %v761 = vpack.c.b16 %v681, %v679
  %v762 = vpack.c.b16 %v682, %v680
  %v763 = vpack.c.b16 %v685, %v683
  %v764 = vpack.c.b16 %v686, %v684
  %v765 = vpack.c.b16 %v689, %v687
  %v766 = vpack.c.b16 %v690, %v688
  %v767 = vpack.c.b16 %v693, %v691
  %v768 = vpack.c.b16 %v694, %v692
  %v769 = vpack.c.b16 %v697, %v695
  %v770 = vpack.c.b16 %v698, %v696
  %v771 = vpack.c.b16 %v701, %v699
  %v772 = vpack.c.b16 %v702, %v700
  %v773 = vpack.c.b16 %v705, %v703
  %v774 = vpack.c.b16 %v706, %v704
  %v775 = vpack.c.b16 %v709, %v707
  %v776 = vpack.c.b16 %v710, %v708
  %v777 = vpack.c.b16 %v713, %v711
  %v778 = vpack.c.b16 %v714, %v712
  %843 = vmatpush.bf16.msra.mxu0 %v729
  %844 = vmatpush.bf16.msra.mxu0 %v727
  %845 = vmatpush.bf16.msra.mxu0 %v725
  %846 = vmatpush.bf16.msra.mxu0 %v723
  %847 = vmatpush.bf16.msra.mxu0 %v721
  %848 = vmatpush.bf16.msra.mxu0 %v719
  %849 = vmatpush.bf16.msra.mxu0 %v717
  %850 = vmatpush.bf16.msra.mxu0 %v715
  %851 = vmatmul.bf16.gmra.mxu0 %v443
  %v852 = vpop.f32.mrf.mxu0
  %v853 = vadd.f32 0.0, %v852
  %v854 = vpop.f32.mrf.mxu0
  %v855 = vadd.f32 0.0, %v854
  %856 = vmatmul.bf16.gmra.mxu0 %v447
  %v857 = vpop.f32.mrf.mxu0
  %v858 = vadd.f32 0.0, %v857
  %v859 = vpop.f32.mrf.mxu0
  %v860 = vadd.f32 0.0, %v859
  %861 = vmatmul.bf16.gmra.mxu0 %v451
  %v862 = vpop.f32.mrf.mxu0
  %v863 = vadd.f32 0.0, %v862
  %v864 = vpop.f32.mrf.mxu0
  %v865 = vadd.f32 0.0, %v864
  %866 = vmatmul.bf16.gmra.mxu0 %v455
  %v867 = vpop.f32.mrf.mxu0
  %v868 = vadd.f32 0.0, %v867
  %v869 = vpop.f32.mrf.mxu0
  %870 = vdwg.mxu0
  %871 = vmatpush.bf16.msra.mxu0 %v745
  %872 = vmatpush.bf16.msra.mxu0 %v743
  %873 = vmatpush.bf16.msra.mxu0 %v741
  %874 = vmatpush.bf16.msra.mxu0 %v739
  %875 = vmatpush.bf16.msra.mxu0 %v737
  %876 = vmatpush.bf16.msra.mxu0 %v735
  %877 = vmatpush.bf16.msra.mxu0 %v733
  %878 = vmatpush.bf16.msra.mxu0 %v731
  %879 = vmatmul.bf16.gmra.mxu0 %v444
  %v880 = vpop.f32.mrf.mxu0
  %v881 = vadd.f32 %v853, %v880
  %v882 = vpop.f32.mrf.mxu0
  %v883 = vadd.f32 %v855, %v882
  %884 = vmatmul.bf16.gmra.mxu0 %v448
  %v885 = vpop.f32.mrf.mxu0
  %v886 = vadd.f32 %v858, %v885
  %v887 = vpop.f32.mrf.mxu0
  %v888 = vadd.f32 %v860, %v887
  %889 = vmatmul.bf16.gmra.mxu0 %v452
  %v890 = vpop.f32.mrf.mxu0
  %v891 = vadd.f32 %v863, %v890
  %v892 = vpop.f32.mrf.mxu0
  %v893 = vadd.f32 %v865, %v892
  %894 = vmatmul.bf16.gmra.mxu0 %v456
  %v895 = vpop.f32.mrf.mxu0
  %v896 = vadd.f32 %v868, %v895
  %v897 = vpop.f32.mrf.mxu0
  %898 = vdwg.mxu0
  %899 = vmatpush.bf16.msra.mxu0 %v761
  %900 = vmatpush.bf16.msra.mxu0 %v759
  %901 = vmatpush.bf16.msra.mxu0 %v757
  %902 = vmatpush.bf16.msra.mxu0 %v755
  %903 = vmatpush.bf16.msra.mxu0 %v753
  %904 = vmatpush.bf16.msra.mxu0 %v751
  %905 = vmatpush.bf16.msra.mxu0 %v749
  %906 = vmatpush.bf16.msra.mxu0 %v747
  %907 = vmatmul.bf16.gmra.mxu0 %v445
  %v908 = vpop.f32.mrf.mxu0
  %v909 = vadd.f32 %v881, %v908
  %v910 = vpop.f32.mrf.mxu0
  %v911 = vadd.f32 %v883, %v910
  %912 = vmatmul.bf16.gmra.mxu0 %v449
  %v913 = vpop.f32.mrf.mxu0
  %v914 = vadd.f32 %v886, %v913
  %v915 = vpop.f32.mrf.mxu0
  %v916 = vadd.f32 %v888, %v915
  %917 = vmatmul.bf16.gmra.mxu0 %v453
  %v918 = vpop.f32.mrf.mxu0
  %v919 = vadd.f32 %v891, %v918
  %v920 = vpop.f32.mrf.mxu0
  %v921 = vadd.f32 %v893, %v920
  %922 = vmatmul.bf16.gmra.mxu0 %v457
  %v923 = vpop.f32.mrf.mxu0
  %v924 = vadd.f32 %v896, %v923
  %v925 = vpop.f32.mrf.mxu0
  %926 = vdwg.mxu0
  %927 = vmatpush.bf16.msra.mxu0 %v777
  %928 = vmatpush.bf16.msra.mxu0 %v775
  %929 = vmatpush.bf16.msra.mxu0 %v773
  %930 = vmatpush.bf16.msra.mxu0 %v771
  %931 = vmatpush.bf16.msra.mxu0 %v769
  %932 = vmatpush.bf16.msra.mxu0 %v767
  %933 = vmatpush.bf16.msra.mxu0 %v765
  %934 = vmatpush.bf16.msra.mxu0 %v763
  %935 = vmatmul.bf16.gmra.mxu0 %v446
  %v936 = vpop.f32.mrf.mxu0
  %v937 = vadd.f32 %v909, %v936
  %v938 = vpop.f32.mrf.mxu0
  %v939 = vadd.f32 %v911, %v938
  %940 = vmatmul.bf16.gmra.mxu0 %v450
  %v941 = vpop.f32.mrf.mxu0
  %v942 = vadd.f32 %v914, %v941
  %v943 = vpop.f32.mrf.mxu0
  %v944 = vadd.f32 %v916, %v943
  %945 = vmatmul.bf16.gmra.mxu0 %v454
  %v946 = vpop.f32.mrf.mxu0
  %v947 = vadd.f32 %v919, %v946
  %v948 = vpop.f32.mrf.mxu0
  %v949 = vadd.f32 %v921, %v948
  %950 = vmatmul.bf16.gmra.mxu0 %v458
  %v951 = vpop.f32.mrf.mxu0
  %v952 = vadd.f32 %v924, %v951
  %v953 = vpop.f32.mrf.mxu0
  %954 = vdwg.mxu0
  %955 = vmatpush.bf16.msra.mxu0 %v730
  %956 = vmatpush.bf16.msra.mxu0 %v728
  %957 = vmatpush.bf16.msra.mxu0 %v726
  %958 = vmatpush.bf16.msra.mxu0 %v724
  %959 = vmatpush.bf16.msra.mxu0 %v722
  %960 = vmatpush.bf16.msra.mxu0 %v720
  %961 = vmatpush.bf16.msra.mxu0 %v718
  %962 = vmatpush.bf16.msra.mxu0 %v716
  %963 = vmatmul.bf16.gmra.mxu0 %v443
  %v964 = vpop.f32.mrf.mxu0
  %v965 = vadd.f32 0.0, %v964
  %v966 = vpop.f32.mrf.mxu0
  %v967 = vadd.f32 0.0, %v966
  %968 = vmatmul.bf16.gmra.mxu0 %v447
  %v969 = vpop.f32.mrf.mxu0
  %v970 = vadd.f32 0.0, %v969
  %v971 = vpop.f32.mrf.mxu0
  %v972 = vadd.f32 0.0, %v971
  %973 = vmatmul.bf16.gmra.mxu0 %v451
  %v974 = vpop.f32.mrf.mxu0
  %v975 = vadd.f32 0.0, %v974
  %v976 = vpop.f32.mrf.mxu0
  %v977 = vadd.f32 0.0, %v976
  %978 = vmatmul.bf16.gmra.mxu0 %v455
  %v979 = vpop.f32.mrf.mxu0
  %v980 = vadd.f32 0.0, %v979
  %v981 = vpop.f32.mrf.mxu0
  %982 = vdwg.mxu0
  %983 = vmatpush.bf16.msra.mxu0 %v746
  %984 = vmatpush.bf16.msra.mxu0 %v744
  %985 = vmatpush.bf16.msra.mxu0 %v742
  %986 = vmatpush.bf16.msra.mxu0 %v740
  %987 = vmatpush.bf16.msra.mxu0 %v738
  %988 = vmatpush.bf16.msra.mxu0 %v736
  %989 = vmatpush.bf16.msra.mxu0 %v734
  %990 = vmatpush.bf16.msra.mxu0 %v732
  %991 = vmatmul.bf16.gmra.mxu0 %v444
  %v992 = vpop.f32.mrf.mxu0
  %v993 = vadd.f32 %v965, %v992
  %v994 = vpop.f32.mrf.mxu0
  %v995 = vadd.f32 %v967, %v994
  %996 = vmatmul.bf16.gmra.mxu0 %v448
  %v997 = vpop.f32.mrf.mxu0
  %v998 = vadd.f32 %v970, %v997
  %v999 = vpop.f32.mrf.mxu0
  %v1000 = vadd.f32 %v972, %v999
  %1001 = vmatmul.bf16.gmra.mxu0 %v452
  %v1002 = vpop.f32.mrf.mxu0
  %v1003 = vadd.f32 %v975, %v1002
  %v1004 = vpop.f32.mrf.mxu0
  %v1005 = vadd.f32 %v977, %v1004
  %1006 = vmatmul.bf16.gmra.mxu0 %v456
  %v1007 = vpop.f32.mrf.mxu0
  %v1008 = vadd.f32 %v980, %v1007
  %v1009 = vpop.f32.mrf.mxu0
  %1010 = vdwg.mxu0
  %1011 = vmatpush.bf16.msra.mxu0 %v762
  %1012 = vmatpush.bf16.msra.mxu0 %v760
  %1013 = vmatpush.bf16.msra.mxu0 %v758
  %1014 = vmatpush.bf16.msra.mxu0 %v756
  %1015 = vmatpush.bf16.msra.mxu0 %v754
  %1016 = vmatpush.bf16.msra.mxu0 %v752
  %1017 = vmatpush.bf16.msra.mxu0 %v750
  %1018 = vmatpush.bf16.msra.mxu0 %v748
  %1019 = vmatmul.bf16.gmra.mxu0 %v445
  %v1020 = vpop.f32.mrf.mxu0
  %v1021 = vadd.f32 %v993, %v1020
  %v1022 = vpop.f32.mrf.mxu0
  %v1023 = vadd.f32 %v995, %v1022
  %1024 = vmatmul.bf16.gmra.mxu0 %v449
  %v1025 = vpop.f32.mrf.mxu0
  %v1026 = vadd.f32 %v998, %v1025
  %v1027 = vpop.f32.mrf.mxu0
  %v1028 = vadd.f32 %v1000, %v1027
  %1029 = vmatmul.bf16.gmra.mxu0 %v453
  %v1030 = vpop.f32.mrf.mxu0
  %v1031 = vadd.f32 %v1003, %v1030
  %v1032 = vpop.f32.mrf.mxu0
  %v1033 = vadd.f32 %v1005, %v1032
  %1034 = vmatmul.bf16.gmra.mxu0 %v457
  %v1035 = vpop.f32.mrf.mxu0
  %v1036 = vadd.f32 %v1008, %v1035
  %v1037 = vpop.f32.mrf.mxu0
  %1038 = vdwg.mxu0
  %1039 = vmatpush.bf16.msra.mxu0 %v778
  %1040 = vmatpush.bf16.msra.mxu0 %v776
  %1041 = vmatpush.bf16.msra.mxu0 %v774
  %1042 = vmatpush.bf16.msra.mxu0 %v772
  %1043 = vmatpush.bf16.msra.mxu0 %v770
  %1044 = vmatpush.bf16.msra.mxu0 %v768
  %1045 = vmatpush.bf16.msra.mxu0 %v766
  %1046 = vmatpush.bf16.msra.mxu0 %v764
  %1047 = vmatmul.bf16.gmra.mxu0 %v446
  %v1048 = vpop.f32.mrf.mxu0
  %v1049 = vadd.f32 %v1021, %v1048
  %v1050 = vpop.f32.mrf.mxu0
  %v1051 = vadd.f32 %v1023, %v1050
  %1052 = vmatmul.bf16.gmra.mxu0 %v450
  %v1053 = vpop.f32.mrf.mxu0
  %v1054 = vadd.f32 %v1026, %v1053
  %v1055 = vpop.f32.mrf.mxu0
  %v1056 = vadd.f32 %v1028, %v1055
  %1057 = vmatmul.bf16.gmra.mxu0 %v454
  %v1058 = vpop.f32.mrf.mxu0
  %v1059 = vadd.f32 %v1031, %v1058
  %v1060 = vpop.f32.mrf.mxu0
  %v1061 = vadd.f32 %v1033, %v1060
  %1062 = vmatmul.bf16.gmra.mxu0 %v458
  %v1063 = vpop.f32.mrf.mxu0
  %v1064 = vadd.f32 %v1036, %v1063
  %v1065 = vpop.f32.mrf.mxu0
  %1066 = vdwg.mxu0
  %v1067 = vadd.f32 %v937, %v939
  %v1068 = vadd.f32 %v1067, %v942
  %v1069 = vadd.f32 %v1068, %v944
  %v1070 = vadd.f32 %v1069, %v947
  %v1071 = vadd.f32 %v1070, %v949
  %vm1072 = vcmask 1040384
  %v1073 = vsel %vm1072, %v952, 0.0
  %v1074 = vadd.f32 %v1071, %v1073
  %v1075 = vrot.slane %v1074, 4
  %v1076 = vadd.f32 %v1074, %v1075
  %v1077 = vrot.slane %v1076, 2
  %v1078 = vadd.f32 %v1076, %v1077
  %v1079 = vrot.slane %v1078, 1
  %v1080 = vadd.f32 %v1078, %v1079
  %v1081 = vadd.f32 %v1049, %v1051
  %v1082 = vadd.f32 %v1081, %v1054
  %v1083 = vadd.f32 %v1082, %v1056
  %v1084 = vadd.f32 %v1083, %v1059
  %v1085 = vadd.f32 %v1084, %v1061
  %v1086 = vsel %vm1072, %v1064, 0.0
  %v1087 = vadd.f32 %v1085, %v1086
  %v1088 = vrot.slane %v1087, 4
  %v1089 = vadd.f32 %v1087, %v1088
  %v1090 = vrot.slane %v1089, 2
  %v1091 = vadd.f32 %v1089, %v1090
  %v1092 = vrot.slane %v1091, 1
  %v1093 = vadd.f32 %v1091, %v1092
  %v1094 = vmul.f32 %v1080, 0.020408163
  %v1095 = vmul.f32 %v1093, 0.020408163
  %v1096 = vsub.f32 %v937, %v1094
  %v1097 = vsub.f32 %v1049, %v1095
  %v1098 = vsub.f32 %v939, %v1094
  %v1099 = vsub.f32 %v1051, %v1095
  %v1100 = vsub.f32 %v942, %v1094
  %v1101 = vsub.f32 %v1054, %v1095
  %v1102 = vsub.f32 %v944, %v1094
  %v1103 = vsub.f32 %v1056, %v1095
  %v1104 = vsub.f32 %v947, %v1094
  %v1105 = vsub.f32 %v1059, %v1095
  %v1106 = vsub.f32 %v949, %v1094
  %v1107 = vsub.f32 %v1061, %v1095
  %v1108 = vsub.f32 %v952, %v1094
  %v1109 = vsub.f32 %v1064, %v1095
  %v1110 = vmul.f32 %v1096, %v1096
  %v1111 = vmul.f32 %v1097, %v1097
  %v1112 = vmul.f32 %v1098, %v1098
  %v1113 = vmul.f32 %v1099, %v1099
  %v1114 = vmul.f32 %v1100, %v1100
  %v1115 = vmul.f32 %v1101, %v1101
  %v1116 = vmul.f32 %v1102, %v1102
  %v1117 = vmul.f32 %v1103, %v1103
  %v1118 = vmul.f32 %v1104, %v1104
  %v1119 = vmul.f32 %v1105, %v1105
  %v1120 = vmul.f32 %v1106, %v1106
  %v1121 = vmul.f32 %v1107, %v1107
  %v1122 = vmul.f32 %v1108, %v1108
  %v1123 = vmul.f32 %v1109, %v1109
  %v1124 = vadd.f32 %v1110, %v1112
  %v1125 = vadd.f32 %v1124, %v1114
  %v1126 = vadd.f32 %v1125, %v1116
  %v1127 = vadd.f32 %v1126, %v1118
  %v1128 = vadd.f32 %v1127, %v1120
  %v1129 = vsel %vm1072, %v1122, 0.0
  %v1130 = vadd.f32 %v1128, %v1129
  %v1131 = vrot.slane %v1130, 4
  %v1132 = vadd.f32 %v1130, %v1131
  %v1133 = vrot.slane %v1132, 2
  %v1134 = vadd.f32 %v1132, %v1133
  %v1135 = vrot.slane %v1134, 1
  %v1136 = vadd.f32 %v1134, %v1135
  %v1137 = vadd.f32 %v1111, %v1113
  %v1138 = vadd.f32 %v1137, %v1115
  %v1139 = vadd.f32 %v1138, %v1117
  %v1140 = vadd.f32 %v1139, %v1119
  %v1141 = vadd.f32 %v1140, %v1121
  %v1142 = vsel %vm1072, %v1123, 0.0
  %v1143 = vadd.f32 %v1141, %v1142
  %v1144 = vrot.slane %v1143, 4
  %v1145 = vadd.f32 %v1143, %v1144
  %v1146 = vrot.slane %v1145, 2
  %v1147 = vadd.f32 %v1145, %v1146
  %v1148 = vrot.slane %v1147, 1
  %v1149 = vadd.f32 %v1147, %v1148
  %v1150 = vmul.f32 %v1136, 0.020408163
  %v1151 = vmul.f32 %v1149, 0.020408163
  %v1152 = vadd.f32 %v1150, 0.001
  %v1153 = vadd.f32 %v1151, 0.001
  %v1154 = vrsqrt.pop %v1152
  %v1155 = vmul.f32 %v1154, %v1152
  %v1156 = vmul.f32 %v1155, %v1154
  %v1157 = vmul.f32 0.5, %v1156
  %v1158 = vsub.f32 1.5, %v1157
  %v1159 = vmul.f32 %v1154, %v1158
  %vm1160 = vweird.f32 %v1152
  %vm1161 = vweird.f32 %v1154
  %vm1162 = vmor %vm1160, %vm1161
  %v1163 = vsel %vm1162, %v1154, %v1159
  %v1164 = vrsqrt.pop %v1153
  %v1165 = vmul.f32 %v1164, %v1153
  %v1166 = vmul.f32 %v1165, %v1164
  %v1167 = vmul.f32 0.5, %v1166
  %v1168 = vsub.f32 1.5, %v1167
  %v1169 = vmul.f32 %v1164, %v1168
  %vm1170 = vweird.f32 %v1153
  %vm1171 = vweird.f32 %v1164
  %vm1172 = vmor %vm1170, %vm1171
  %v1173 = vsel %vm1172, %v1164, %v1169
  %v1174 = vld [vmem:[%s5] sm:$0x3]
  %v1176 = vperm.slane %v1174, 0
  %v1177 = vperm.slane %v1174, 1
  %v1180 = vmul.f32 %v1176, %v1096
  %v1181 = vmul.f32 %v1177, %v1097
  %v1182 = vmul.f32 %v1176, %v1098
  %v1183 = vmul.f32 %v1177, %v1099
  %v1184 = vmul.f32 %v1176, %v1100
  %v1185 = vmul.f32 %v1177, %v1101
  %v1186 = vmul.f32 %v1176, %v1102
  %v1187 = vmul.f32 %v1177, %v1103
  %v1188 = vmul.f32 %v1176, %v1104
  %v1189 = vmul.f32 %v1177, %v1105
  %v1190 = vmul.f32 %v1176, %v1106
  %v1191 = vmul.f32 %v1177, %v1107
  %v1192 = vmul.f32 %v1176, %v1108
  %v1193 = vmul.f32 %v1177, %v1109
  %v1194 = vmul.f32 %v1180, %v1163
  %v1195 = vmul.f32 %v1181, %v1173
  %v1196 = vmul.f32 %v1182, %v1163
  %v1197 = vmul.f32 %v1183, %v1173
  %v1198 = vmul.f32 %v1184, %v1163
  %v1199 = vmul.f32 %v1185, %v1173
  %v1200 = vmul.f32 %v1186, %v1163
  %v1201 = vmul.f32 %v1187, %v1173
  %v1202 = vmul.f32 %v1188, %v1163
  %v1203 = vmul.f32 %v1189, %v1173
  %v1204 = vmul.f32 %v1190, %v1163
  %v1205 = vmul.f32 %v1191, %v1173
  %v1206 = vmul.f32 %v1192, %v1163
  %v1207 = vmul.f32 %v1193, %v1173
  %v1208 = vld [vmem:[%s6] sm:$0x3]
  %v1210 = vperm.slane %v1208, 0
  %v1211 = vperm.slane %v1208, 1
  %v1214 = vadd.f32 %v1194, %v1210
  %v1215 = vadd.f32 %v1195, %v1211
  %v1216 = vadd.f32 %v1196, %v1210
  %v1217 = vadd.f32 %v1197, %v1211
  %v1218 = vadd.f32 %v1198, %v1210
  %v1219 = vadd.f32 %v1199, %v1211
  %v1220 = vadd.f32 %v1200, %v1210
  %v1221 = vadd.f32 %v1201, %v1211
  %v1222 = vadd.f32 %v1202, %v1210
  %v1223 = vadd.f32 %v1203, %v1211
  %v1224 = vadd.f32 %v1204, %v1210
  %v1225 = vadd.f32 %v1205, %v1211
  %v1226 = vadd.f32 %v1206, %v1210
  %v1227 = vadd.f32 %v1207, %v1211
  %1228 = vst [vmem:[%s7] sm:$0xff] %v1214
  %1229 = vst [vmem:[%s7 + $0x8] sm:$0xff] %v1215
  %1230 = vst [vmem:[%s7 + $0x10] sm:$0xff] %v1216
  %1231 = vst [vmem:[%s7 + $0x18] sm:$0xff] %v1217
  %1232 = vst [vmem:[%s7 + $0x20] sm:$0xff] %v1218
  %1233 = vst [vmem:[%s7 + $0x28] sm:$0xff] %v1219
  %1234 = vst [vmem:[%s7 + $0x30] sm:$0xff] %v1220
  %1235 = vst [vmem:[%s7 + $0x38] sm:$0xff] %v1221
  %1236 = vst [vmem:[%s7 + $0x40] sm:$0xff] %v1222
  %1237 = vst [vmem:[%s7 + $0x48] sm:$0xff] %v1223
  %1238 = vst [vmem:[%s7 + $0x50] sm:$0xff] %v1224
  %1239 = vst [vmem:[%s7 + $0x58] sm:$0xff] %v1225
  %1240 = vst [vmem:[%s7 + $0x60] sm:$0x1] %v1226
  %1241 = vst [vmem:[%s7 + $0x68] sm:$0x1] %v1227
  // Predicated region
  $region30: #{fused_se_conv_bn_nchw.1} parent=0 // pred_check
    _
  $region31: #{fused_se_conv_bn_nchw.1} parent=0 // pred_check_branch
    %1243 = sbr.rel (0) target = $region33
  $region32: #{fused_se_conv_bn_nchw.1} parent=0 // pred_region
    _
  $region33: #{fused_se_conv_bn_nchw.1} parent=0 // pred_fallthru
    _
  // Predicated region
  $region34: #{fused_se_conv_bn_nchw.1} parent=0 // pred_check
    _
  $region35: #{fused_se_conv_bn_nchw.1} parent=0 // pred_check_branch
    %1245 = sbr.rel (0) target = $region37
  $region36: #{fused_se_conv_bn_nchw.1} parent=0 // pred_region
    _
  $region37: #{fused_se_conv_bn_nchw.1} parent=0 // pred_fallthru
    _

</llo_original>
